<compile_context>
chip_gen: v5e
topology: v5e:2x2
jax: 0.10.0
libtpu: 0.0.40
codegen_flags: <defaults>
</compile_context>

<pallas_src>
import functools

import jax
import jax.numpy as jnp
from jax import lax
from jax.experimental import pallas as pl
from jax.experimental.pallas import tpu as pltpu


def _round_up(v, m):
    return ((v + m - 1) // m) * m


def _pad_to(a, shape):
    pads = [(0, t - s) for s, t in zip(a.shape, shape)]
    if all(p == (0, 0) for p in pads):
        return a
    return jnp.pad(a, pads)


def _const_spec(shape):
    # Block == full array, same block every grid step -> loaded once, resident.
    return pl.BlockSpec(shape, lambda i: (0,) * len(shape))


def _mlp_pyg_kernel(batch_ref, x_ref, invcnt_ref,
                    w0_ref, b0_ref, w1_ref, b1_ref, w2_ref, b2_ref,
                    wp_ref, bp_ref,
                    out_ref, pooled_acc):
    step = pl.program_id(0)
    g_pad = invcnt_ref.shape[0]
    tile_n = batch_ref.shape[1]

    @pl.when(step == 0)
    def _init():
        pooled_acc[...] = jnp.zeros_like(pooled_acc)

    # ---- per-node MLP on this node tile (bf16 operands, f32 accumulation) ----
    h = jnp.dot(x_ref[...], w0_ref[...], preferred_element_type=jnp.float32)
    h = jnp.maximum(h + b0_ref[...], 0.0)          # dropout: eval -> identity
    h = jnp.dot(h.astype(jnp.bfloat16), w1_ref[...],
                preferred_element_type=jnp.float32)
    h = jnp.maximum(h + b1_ref[...], 0.0)
    h = jnp.dot(h.astype(jnp.bfloat16), w2_ref[...],
                preferred_element_type=jnp.float32)
    h = jnp.maximum(h + b2_ref[...], 0.0)

    # ---- in-kernel graph-assignment mask: mask[g, n] = (batch[n] == g) -------
    # Padded nodes carry batch id == g_pad so they never match any graph row.
    gids = lax.broadcasted_iota(jnp.int32, (g_pad, tile_n), 0)
    mask = (batch_ref[...] == gids).astype(jnp.float32)        # [G_pad, tile_n]
    pooled_acc[...] += jnp.dot(mask, h, preferred_element_type=jnp.float32)

    # ---- finalize: mean-scale + predict, only on the last node tile ----------
    @pl.when(step == pl.num_programs(0) - 1)
    def _finalize():
        pooled = pooled_acc[...] * invcnt_ref[...]             # sum -> mean
        out = jnp.dot(pooled, wp_ref[...].astype(jnp.float32),
                      preferred_element_type=jnp.float32)
        out_ref[...] = out + bp_ref[...]


@functools.partial(jax.jit, static_argnames=("num_graphs", "tile_n"))
def mlp_pyg_forward(x, batch, params, num_graphs, *, tile_n=512):
    """x: [N, in_channels] f32, batch: [N] int32 graph ids in [0, num_graphs)."""
    n_nodes, in_channels = x.shape
    hidden = params["w0"].shape[1]
    n_vars = params["wp"].shape[1]

    hp = _round_up(hidden, 128)              # lane-dense hidden dim
    vp = _round_up(n_vars, 128)              # lane-dense output dim
    gp = _round_up(num_graphs, 8)            # sublane-dense graph dim
    tile_n = max(128, _round_up(tile_n, 128))
    np_nodes = _round_up(max(n_nodes, 1), tile_n)
    num_tiles = np_nodes // tile_n

    # ---- wrapper glue (cheap XLA ops): padding, casts, inverse counts -------
    x_p = _pad_to(x, (np_nodes, in_channels)).astype(jnp.bfloat16)
    batch_p = jnp.full((1, np_nodes), gp, dtype=jnp.int32)      # padded ids match nothing
    batch_p = batch_p.at[0, :n_nodes].set(batch.astype(jnp.int32))

    counts = jnp.zeros((gp,), jnp.float32).at[batch].add(1.0)
    invcnt = (1.0 / jnp.maximum(counts, 1.0)).reshape(gp, 1)

    w0 = _pad_to(params["w0"], (in_channels, hp)).astype(jnp.bfloat16)
    b0 = _pad_to(params["b0"], (1, hp)).astype(jnp.float32)
    w1 = _pad_to(params["w1"], (hp, hp)).astype(jnp.bfloat16)
    b1 = _pad_to(params["b1"], (1, hp)).astype(jnp.float32)
    w2 = _pad_to(params["w2"], (hp, hp)).astype(jnp.bfloat16)
    b2 = _pad_to(params["b2"], (1, hp)).astype(jnp.float32)
    wp = _pad_to(params["wp"], (hp, vp)).astype(jnp.bfloat16)
    bp = _pad_to(params["bp"], (1, vp)).astype(jnp.float32)

    in_specs = [
        pl.BlockSpec((1, tile_n), lambda i: (0, i)),            # batch ids
        pl.BlockSpec((tile_n, in_channels), lambda i: (i, 0)),  # x node tile
        _const_spec((gp, 1)),                                   # 1/count
        _const_spec((in_channels, hp)), _const_spec((1, hp)),   # W0, b0
        _const_spec((hp, hp)), _const_spec((1, hp)),            # W1, b1
        _const_spec((hp, hp)), _const_spec((1, hp)),            # W2, b2
        _const_spec((hp, vp)), _const_spec((1, vp)),            # Wp, bp
    ]

    grid_spec = pltpu.PrefetchScalarGridSpec(
        num_scalar_prefetch=0,
        grid=(num_tiles,),
        in_specs=in_specs,
        out_specs=pl.BlockSpec((gp, vp), lambda i: (0, 0)),
        scratch_shapes=[pltpu.VMEM((gp, hp), jnp.float32)],
    )

    flops = (2 * np_nodes * (in_channels * hp + 2 * hp * hp)
             + 2 * gp * np_nodes * hp
             + 2 * gp * hp * vp)
    bytes_accessed = (x_p.size * 2 + batch_p.size * 4 + invcnt.size * 4
                      + (w0.size + w1.size + w2.size + wp.size) * 2
                      + (b0.size + b1.size + b2.size + bp.size) * 4
                      + gp * vp * 4)

    out_padded = pl.pallas_call(
        _mlp_pyg_kernel,
        out_shape=jax.ShapeDtypeStruct((gp, vp), jnp.float32),
        grid_spec=grid_spec,
        compiler_params=pltpu.CompilerParams(
            dimension_semantics=("arbitrary",)),   # node axis is a reduction
        cost_estimate=pl.CostEstimate(flops=flops, transcendentals=0,
                                      bytes_accessed=bytes_accessed),
    )(batch_p, x_p, invcnt, w0, b0, w1, b1, w2, b2, wp, bp)

    return out_padded[:num_graphs, :n_vars]


def init_params(key, in_channels, hidden_channels, n_vars):
    ks = jax.random.split(key, 8)
    scale = 0.1
    return {
        "w0": scale * jax.random.normal(ks[0], (in_channels, hidden_channels), jnp.float32),
        "b0": scale * jax.random.normal(ks[1], (1, hidden_channels), jnp.float32),
        "w1": scale * jax.random.normal(ks[2], (hidden_channels, hidden_channels), jnp.float32),
        "b1": scale * jax.random.normal(ks[3], (1, hidden_channels), jnp.float32),
        "w2": scale * jax.random.normal(ks[4], (hidden_channels, hidden_channels), jnp.float32),
        "b2": scale * jax.random.normal(ks[5], (1, hidden_channels), jnp.float32),
        "wp": scale * jax.random.normal(ks[6], (hidden_channels, n_vars), jnp.float32),
        "bp": scale * jax.random.normal(ks[7], (1, n_vars), jnp.float32),
    }


if __name__ == "__main__":
    key = jax.random.PRNGKey(0)
    in_channels = 8
    hidden_channels = 32
    n_vars = 3
    num_graphs = 2
    nodes_per_graph = 100
    n_nodes = num_graphs * nodes_per_graph   # 200 nodes -> 2 node tiles of 128

    k_x, k_p = jax.random.split(key)
    x = jax.random.normal(k_x, (n_nodes, in_channels), jnp.float32)
    batch = jnp.repeat(jnp.arange(num_graphs, dtype=jnp.int32), nodes_per_graph)
    params = init_params(k_p, in_channels, hidden_channels, n_vars)

    out = mlp_pyg_forward(x, batch, params, num_graphs, tile_n=128)
    jax.block_until_ready(out)
    assert out.shape == (num_graphs, n_vars)

    # Pure-JAX reference using the same bf16-operand / f32-accumulate recipe.
    xb = x.astype(jnp.bfloat16)
    w0b = params["w0"].astype(jnp.bfloat16)
    w1b = params["w1"].astype(jnp.bfloat16)
    w2b = params["w2"].astype(jnp.bfloat16)
    wpf = params["wp"].astype(jnp.bfloat16).astype(jnp.float32)
    h = jnp.maximum(jnp.dot(xb, w0b, preferred_element_type=jnp.float32) + params["b0"], 0.0)
    h = jnp.maximum(jnp.dot(h.astype(jnp.bfloat16), w1b,
                            preferred_element_type=jnp.float32) + params["b1"], 0.0)
    h = jnp.maximum(jnp.dot(h.astype(jnp.bfloat16), w2b,
                            preferred_element_type=jnp.float32) + params["b2"], 0.0)
    pooled = jnp.stack([h[batch == g].mean(axis=0) for g in range(num_graphs)])
    ref = pooled @ wpf + params["bp"]

    assert jnp.allclose(out, ref, atol=2e-3, rtol=2e-3), (out, ref)
    print("KERNEL_OK")
</pallas_src>

<mosaic_0001>
module attributes {stable_mosaic.version = 11 : i64} {
  func.func @_mlp_pyg_kernel(%arg0: i32, %arg1: memref<1x128xi32, #tpu.memory_space<vmem>>, %arg2: memref<128x8xbf16, #tpu.memory_space<vmem>>, %arg3: memref<8x1xf32, #tpu.memory_space<vmem>>, %arg4: memref<8x128xbf16, #tpu.memory_space<vmem>>, %arg5: memref<1x128xf32, #tpu.memory_space<vmem>>, %arg6: memref<128x128xbf16, #tpu.memory_space<vmem>>, %arg7: memref<1x128xf32, #tpu.memory_space<vmem>>, %arg8: memref<128x128xbf16, #tpu.memory_space<vmem>>, %arg9: memref<1x128xf32, #tpu.memory_space<vmem>>, %arg10: memref<128x128xbf16, #tpu.memory_space<vmem>>, %arg11: memref<1x128xf32, #tpu.memory_space<vmem>>, %arg12: memref<8x128xf32, #tpu.memory_space<vmem>>, %arg13: memref<8x128xf32, #tpu.memory_space<vmem>>) attributes {dimension_semantics = [#tpu.dimension_semantics<arbitrary>], iteration_bounds = array<i64: 2>, scalar_prefetch = 0 : i64, scratch_operands = 1 : i64, tpu.core_type = #tpu.core_type<tc>, window_params = [{transform_indices = @transform_0, window_bounds = array<i64: 1, 128>}, {transform_indices = @transform_1, window_bounds = array<i64: 128, 8>}, {pipeline_mode = #tpu.pipeline_mode<synchronous>, transform_indices = @transform_2, window_bounds = array<i64: 8, 1>}, {pipeline_mode = #tpu.pipeline_mode<synchronous>, transform_indices = @transform_3, window_bounds = array<i64: 8, 128>}, {pipeline_mode = #tpu.pipeline_mode<synchronous>, transform_indices = @transform_4, window_bounds = array<i64: 1, 128>}, {pipeline_mode = #tpu.pipeline_mode<synchronous>, transform_indices = @transform_5, window_bounds = array<i64: 128, 128>}, {pipeline_mode = #tpu.pipeline_mode<synchronous>, transform_indices = @transform_6, window_bounds = array<i64: 1, 128>}, {pipeline_mode = #tpu.pipeline_mode<synchronous>, transform_indices = @transform_7, window_bounds = array<i64: 128, 128>}, {pipeline_mode = #tpu.pipeline_mode<synchronous>, transform_indices = @transform_8, window_bounds = array<i64: 1, 128>}, {pipeline_mode = #tpu.pipeline_mode<synchronous>, transform_indices = @transform_9, window_bounds = array<i64: 128, 128>}, {pipeline_mode = #tpu.pipeline_mode<synchronous>, transform_indices = @transform_10, window_bounds = array<i64: 1, 128>}, {pipeline_mode = #tpu.pipeline_mode<synchronous>, transform_indices = @transform_11, window_bounds = array<i64: 8, 128>}]} {
    %c0_i32 = arith.constant 0 : i32
    %0 = arith.cmpi eq, %arg0, %c0_i32 : i32
    %1 = arith.extui %0 : i1 to i32
    %c0_i32_0 = arith.constant 0 : i32
    %2 = arith.cmpi ne, %1, %c0_i32_0 : i32
    scf.if %2 {
      %cst_27 = arith.constant 0.000000e+00 : f32
      %40 = vector.broadcast %cst_27 : f32 to vector<8x128xf32>
      %c0_28 = arith.constant 0 : index
      %c0_29 = arith.constant 0 : index
      %41 = vector.load %arg13[%c0_28, %c0_29] : memref<8x128xf32, #tpu.memory_space<vmem>>, vector<8x128xf32>
      tpu.vector_store %arg13[%c0_28, %c0_29], %40 {strides = array<i32>} : memref<8x128xf32, #tpu.memory_space<vmem>>, vector<8x128xf32>,
    } else {
    }
    %c0 = arith.constant 0 : index
    %c0_1 = arith.constant 0 : index
    %3 = vector.load %arg2[%c0, %c0_1] : memref<128x8xbf16, #tpu.memory_space<vmem>>, vector<128x8xbf16>
    %c0_2 = arith.constant 0 : index
    %c0_3 = arith.constant 0 : index
    %4 = vector.load %arg4[%c0_2, %c0_3] : memref<8x128xbf16, #tpu.memory_space<vmem>>, vector<8x128xbf16>
    %cst = arith.constant dense<0.000000e+00> : vector<128x128xf32>
    %5 = tpu.matmul %3, %4, %cst {dimension_numbers = #tpu.dot_dimension_numbers<[1], [0], [0], [1], [0, 0, 1, 1], [], []>} : vector<128x8xbf16>, vector<8x128xbf16>, vector<128x128xf32> -> vector<128x128xf32>
    %c0_4 = arith.constant 0 : index
    %c0_5 = arith.constant 0 : index
    %6 = vector.load %arg5[%c0_4, %c0_5] : memref<1x128xf32, #tpu.memory_space<vmem>>, vector<1x128xf32>
    %7 = vector.broadcast %6 : vector<1x128xf32> to vector<128x128xf32>
    %8 = arith.addf %5, %7 : vector<128x128xf32>
    %cst_6 = arith.constant 0.000000e+00 : f32
    %9 = vector.broadcast %cst_6 : f32 to vector<128x128xf32>
    %10 = arith.maximumf %8, %9 : vector<128x128xf32>
    %11 = arith.truncf %10 : vector<128x128xf32> to vector<128x128xbf16>
    %c0_7 = arith.constant 0 : index
    %c0_8 = arith.constant 0 : index
    %12 = vector.load %arg6[%c0_7, %c0_8] : memref<128x128xbf16, #tpu.memory_space<vmem>>, vector<128x128xbf16>
    %cst_9 = arith.constant dense<0.000000e+00> : vector<128x128xf32>
    %13 = tpu.matmul %11, %12, %cst_9 {dimension_numbers = #tpu.dot_dimension_numbers<[1], [0], [0], [1], [0, 0, 1, 1], [], []>} : vector<128x128xbf16>, vector<128x128xbf16>, vector<128x128xf32> -> vector<128x128xf32>
    %c0_10 = arith.constant 0 : index
    %c0_11 = arith.constant 0 : index
    %14 = vector.load %arg7[%c0_10, %c0_11] : memref<1x128xf32, #tpu.memory_space<vmem>>, vector<1x128xf32>
    %15 = vector.broadcast %14 : vector<1x128xf32> to vector<128x128xf32>
    %16 = arith.addf %13, %15 : vector<128x128xf32>
    %cst_12 = arith.constant 0.000000e+00 : f32
    %17 = vector.broadcast %cst_12 : f32 to vector<128x128xf32>
    %18 = arith.maximumf %16, %17 : vector<128x128xf32>
    %19 = arith.truncf %18 : vector<128x128xf32> to vector<128x128xbf16>
    %c0_13 = arith.constant 0 : index
    %c0_14 = arith.constant 0 : index
    %20 = vector.load %arg8[%c0_13, %c0_14] : memref<128x128xbf16, #tpu.memory_space<vmem>>, vector<128x128xbf16>
    %cst_15 = arith.constant dense<0.000000e+00> : vector<128x128xf32>
    %21 = tpu.matmul %19, %20, %cst_15 {dimension_numbers = #tpu.dot_dimension_numbers<[1], [0], [0], [1], [0, 0, 1, 1], [], []>} : vector<128x128xbf16>, vector<128x128xbf16>, vector<128x128xf32> -> vector<128x128xf32>
    %c0_16 = arith.constant 0 : index
    %c0_17 = arith.constant 0 : index
    %22 = vector.load %arg9[%c0_16, %c0_17] : memref<1x128xf32, #tpu.memory_space<vmem>>, vector<1x128xf32>
    %23 = vector.broadcast %22 : vector<1x128xf32> to vector<128x128xf32>
    %24 = arith.addf %21, %23 : vector<128x128xf32>
    %cst_18 = arith.constant 0.000000e+00 : f32
    %25 = vector.broadcast %cst_18 : f32 to vector<128x128xf32>
    %26 = arith.maximumf %24, %25 : vector<128x128xf32>
    %27 = tpu.iota {dimensions = array<i32: 0>} : vector<8x128xi32>
    %c0_19 = arith.constant 0 : index
    %c0_20 = arith.constant 0 : index
    %28 = vector.load %arg1[%c0_19, %c0_20] : memref<1x128xi32, #tpu.memory_space<vmem>>, vector<1x128xi32>
    %29 = vector.broadcast %28 : vector<1x128xi32> to vector<8x128xi32>
    %30 = arith.cmpi eq, %29, %27 : vector<8x128xi32>
    %31 = arith.extui %30 : vector<8x128xi1> to vector<8x128xi32>
    %32 = arith.sitofp %31 : vector<8x128xi32> to vector<8x128xf32>
    %c0_21 = arith.constant 0 : index
    %c0_22 = arith.constant 0 : index
    %33 = vector.load %arg13[%c0_21, %c0_22] : memref<8x128xf32, #tpu.memory_space<vmem>>, vector<8x128xf32>
    %cst_23 = arith.constant dense<0.000000e+00> : vector<8x128xf32>
    %34 = tpu.matmul %32, %26, %cst_23 {dimension_numbers = #tpu.dot_dimension_numbers<[1], [0], [0], [1], [0, 0, 1, 1], [], []>} : vector<8x128xf32>, vector<128x128xf32>, vector<8x128xf32> -> vector<8x128xf32>
    %35 = arith.addf %33, %34 : vector<8x128xf32>
    %c0_24 = arith.constant 0 : index
    %c0_25 = arith.constant 0 : index
    %36 = vector.load %arg13[%c0_24, %c0_25] : memref<8x128xf32, #tpu.memory_space<vmem>>, vector<8x128xf32>
    tpu.vector_store %arg13[%c0_24, %c0_25], %35 {strides = array<i32>} : memref<8x128xf32, #tpu.memory_space<vmem>>, vector<8x128xf32>,
    %c1_i32 = arith.constant 1 : i32
    %37 = arith.cmpi eq, %arg0, %c1_i32 : i32
    %38 = arith.extui %37 : i1 to i32
    %c0_i32_26 = arith.constant 0 : i32
    %39 = arith.cmpi ne, %38, %c0_i32_26 : i32
    scf.if %39 {
      %c0_27 = arith.constant 0 : index
      %c0_28 = arith.constant 0 : index
      %40 = vector.load %arg13[%c0_27, %c0_28] : memref<8x128xf32, #tpu.memory_space<vmem>>, vector<8x128xf32>
      %c0_29 = arith.constant 0 : index
      %c0_30 = arith.constant 0 : index
      %41 = vector.load %arg3[%c0_29, %c0_30] : memref<8x1xf32, #tpu.memory_space<vmem>>, vector<8x1xf32>
      %42 = vector.broadcast %41 : vector<8x1xf32> to vector<8x128xf32>
      %43 = arith.mulf %40, %42 : vector<8x128xf32>
      %c0_31 = arith.constant 0 : index
      %c0_32 = arith.constant 0 : index
      %44 = vector.load %arg10[%c0_31, %c0_32] : memref<128x128xbf16, #tpu.memory_space<vmem>>, vector<128x128xbf16>
      %45 = arith.extf %44 : vector<128x128xbf16> to vector<128x128xf32>
      %cst_33 = arith.constant dense<0.000000e+00> : vector<8x128xf32>
      %46 = tpu.matmul %43, %45, %cst_33 {dimension_numbers = #tpu.dot_dimension_numbers<[1], [0], [0], [1], [0, 0, 1, 1], [], []>} : vector<8x128xf32>, vector<128x128xf32>, vector<8x128xf32> -> vector<8x128xf32>
      %c0_34 = arith.constant 0 : index
      %c0_35 = arith.constant 0 : index
      %47 = vector.load %arg11[%c0_34, %c0_35] : memref<1x128xf32, #tpu.memory_space<vmem>>, vector<1x128xf32>
      %48 = vector.broadcast %47 : vector<1x128xf32> to vector<8x128xf32>
      %49 = arith.addf %46, %48 : vector<8x128xf32>
      %c0_36 = arith.constant 0 : index
      %c0_37 = arith.constant 0 : index
      %50 = vector.load %arg12[%c0_36, %c0_37] : memref<8x128xf32, #tpu.memory_space<vmem>>, vector<8x128xf32>
      tpu.vector_store %arg12[%c0_36, %c0_37], %49 {strides = array<i32>} : memref<8x128xf32, #tpu.memory_space<vmem>>, vector<8x128xf32>,
    } else {
    }
    return
  }
  func.func @transform_0(%arg0: i32) -> (i32, i32) {
    %c0_i32 = arith.constant 0 : i32
    %c0_i32_0 = arith.constant 0 : i32
    return %c0_i32, %arg0 : i32, i32
  }
  func.func @transform_1(%arg0: i32) -> (i32, i32) {
    %c0_i32 = arith.constant 0 : i32
    %c0_i32_0 = arith.constant 0 : i32
    return %arg0, %c0_i32 : i32, i32
  }
  func.func @transform_2(%arg0: i32) -> (i32, i32) {
    %c0_i32 = arith.constant 0 : i32
    %c0_i32_0 = arith.constant 0 : i32
    %c0_i32_1 = arith.constant 0 : i32
    return %c0_i32, %c0_i32_0 : i32, i32
  }
  func.func @transform_3(%arg0: i32) -> (i32, i32) {
    %c0_i32 = arith.constant 0 : i32
    %c0_i32_0 = arith.constant 0 : i32
    %c0_i32_1 = arith.constant 0 : i32
    return %c0_i32, %c0_i32_0 : i32, i32
  }
  func.func @transform_4(%arg0: i32) -> (i32, i32) {
    %c0_i32 = arith.constant 0 : i32
    %c0_i32_0 = arith.constant 0 : i32
    %c0_i32_1 = arith.constant 0 : i32
    return %c0_i32, %c0_i32_0 : i32, i32
  }
  func.func @transform_5(%arg0: i32) -> (i32, i32) {
    %c0_i32 = arith.constant 0 : i32
    %c0_i32_0 = arith.constant 0 : i32
    %c0_i32_1 = arith.constant 0 : i32
    return %c0_i32, %c0_i32_0 : i32, i32
  }
  func.func @transform_6(%arg0: i32) -> (i32, i32) {
    %c0_i32 = arith.constant 0 : i32
    %c0_i32_0 = arith.constant 0 : i32
    %c0_i32_1 = arith.constant 0 : i32
    return %c0_i32, %c0_i32_0 : i32, i32
  }
  func.func @transform_7(%arg0: i32) -> (i32, i32) {
    %c0_i32 = arith.constant 0 : i32
    %c0_i32_0 = arith.constant 0 : i32
    %c0_i32_1 = arith.constant 0 : i32
    return %c0_i32, %c0_i32_0 : i32, i32
  }
  func.func @transform_8(%arg0: i32) -> (i32, i32) {
    %c0_i32 = arith.constant 0 : i32
    %c0_i32_0 = arith.constant 0 : i32
    %c0_i32_1 = arith.constant 0 : i32
    return %c0_i32, %c0_i32_0 : i32, i32
  }
  func.func @transform_9(%arg0: i32) -> (i32, i32) {
    %c0_i32 = arith.constant 0 : i32
    %c0_i32_0 = arith.constant 0 : i32
    %c0_i32_1 = arith.constant 0 : i32
    return %c0_i32, %c0_i32_0 : i32, i32
  }
  func.func @transform_10(%arg0: i32) -> (i32, i32) {
    %c0_i32 = arith.constant 0 : i32
    %c0_i32_0 = arith.constant 0 : i32
    %c0_i32_1 = arith.constant 0 : i32
    return %c0_i32, %c0_i32_0 : i32, i32
  }
  func.func @transform_11(%arg0: i32) -> (i32, i32) {
    %c0_i32 = arith.constant 0 : i32
    %c0_i32_0 = arith.constant 0 : i32
    %c0_i32_1 = arith.constant 0 : i32
    return %c0_i32, %c0_i32_0 : i32, i32
  }
}

</mosaic_0001>

<llo_original>
// kernel: mlp_pyg_forward.1
$region0: #{mlp_pyg_forward.1}
  #allocation0 [shape = 'u32[]', space=smem, size = 0x4, offset = 0x4, fixed_abs, tag = 'smem constant byte address 0x4 - core index']
  #allocation1 [shape = 'u32[72,128]{1,0:T(1,128)}', space=vmem, size = 0x9000, scoped, tag = 'internal scratch']
  #allocation2 [shape = 'f32[8,128]{1,0:T(8,128)}', space=vmem, size = 0x1000, scoped, tag = 'scratch operand']
  %s0 = inlined_call_operand.vmem [shape: s32[1,256], index: 0, kind: input, shape index: {}]
  %s1 = inlined_call_operand.vmem [shape: bf16[256,8], index: 1, kind: input, shape index: {}]
  %s2 = inlined_call_operand.vmem [shape: f32[8,1], index: 2, kind: input, shape index: {}]
  %s3 = inlined_call_operand.vmem [shape: bf16[8,128], index: 3, kind: input, shape index: {}]
  %s4 = inlined_call_operand.vmem [shape: f32[1,128], index: 4, kind: input, shape index: {}]
  %s5 = inlined_call_operand.vmem [shape: bf16[128,128], index: 5, kind: input, shape index: {}]
  %s6 = inlined_call_operand.vmem [shape: f32[1,128], index: 6, kind: input, shape index: {}]
  %s7 = inlined_call_operand.vmem [shape: bf16[128,128], index: 7, kind: input, shape index: {}]
  %s8 = inlined_call_operand.vmem [shape: f32[1,128], index: 8, kind: input, shape index: {}]
  %s9 = inlined_call_operand.vmem [shape: bf16[128,128], index: 9, kind: input, shape index: {}]
  %s10 = inlined_call_operand.vmem [shape: f32[1,128], index: 10, kind: input, shape index: {}]
  %s11 = inlined_call_operand.vmem [shape: f32[8,128], index: 11, kind: output, shape index: {}]
  %s12 = sld [smem:[#allocation0]]
  $region85: #{mlp_pyg_forward.1} parent=0
    _
  %s14 = ssub.s32 1, %s12
  %s15 = scalar_select 0, %s14, %s12
  loop: start=0, step=1, limit=4
  $region2: #{mlp_pyg_forward.1} parent=0 // loop_pre_header
    _
  $region3: #{mlp_pyg_forward.1} parent=0 // loop_header
    %s17 = sphi 0, %s21
    %p18 = scmp.ge.s32.totalorder %s17, 4
    %s27 = sphi 0, %s29
    %s30 = sphi 0, %s27
    %s31 = sphi 0, %s30
    %s47 = sphi 0, %s31
    %s53 = sphi 0, %s55
    %s56 = sphi 0, %s53
    %s57 = sphi 0, %s56
    %s73 = sphi 0, %s57
    %s77 = sphi 0, %s77
    %s79 = sphi 0, %s77
    %s80 = sphi 0, %s79
    %s94 = sphi 0, %s80
    %s98 = sphi 0, %s98
    %s100 = sphi 0, %s98
    %s101 = sphi 0, %s100
    %s115 = sphi 0, %s101
    %s119 = sphi 0, %s119
    %s121 = sphi 0, %s119
    %s122 = sphi 0, %s121
    %s136 = sphi 0, %s122
    %s140 = sphi 0, %s140
    %s142 = sphi 0, %s140
    %s143 = sphi 0, %s142
    %s157 = sphi 0, %s143
    %s161 = sphi 0, %s161
    %s163 = sphi 0, %s161
    %s164 = sphi 0, %s163
    %s178 = sphi 0, %s164
    %s182 = sphi 0, %s182
    %s184 = sphi 0, %s182
    %s185 = sphi 0, %s184
    %s199 = sphi 0, %s185
    %s203 = sphi 0, %s203
    %s205 = sphi 0, %s203
    %s206 = sphi 0, %s205
    %s220 = sphi 0, %s206
    %s224 = sphi 0, %s224
    %s226 = sphi 0, %s224
    %s227 = sphi 0, %s226
    %s241 = sphi 0, %s227
    %s245 = sphi 0, %s245
    %s247 = sphi 0, %s245
    %s248 = sphi 0, %s247
    %s262 = sphi 0, %s248
    %s266 = sphi 0, %s266
    %s268 = sphi 0, %s266
    %s269 = sphi 0, %s268
    %s283 = sphi 0, %s269
  $region4: #{mlp_pyg_forward.1} parent=0 // loop_header_branch
    %20 = sbr.rel (%p18) target = $region8
  $region5: #{mlp_pyg_forward.1} parent=0 // loop_body
    %s22 = ssub.s32 %s17, 1
    %s23 = ssub.s32 %s17, 2
    %s24 = sadd.s32 %s17, 1
    %s25 = ssub.s32 %s17, %s24
    %p26 = scmp.eq.s32.totalorder %s25, 0
    %s28 = sadd.s32 %s27, 1
    %s29 = scalar_select %p26, %s27, %s28
    %p32 = pneg %p26
    %p33 = scmp.eq.s32.totalorder %s17, 1
    %p34 = por %p32, %p33
    %p35 = scmp.ne.s32.totalorder %s27, %s30
    %p36 = scmp.eq.s32.totalorder %s17, 0
    %p37 = por %p35, %p36
    %p38 = scmp.ne.s32.totalorder %s27, %s30
    %p39 = scmp.eq.s32.totalorder %s22, 1
    %p40 = por %p38, %p39
    %p41 = scmp.ne.s32.totalorder %s30, %s31
    %p42 = scmp.eq.s32.totalorder %s22, 0
    %p43 = por %p41, %p42
    %p44 = scmp.ne.s32.totalorder %s30, %s31
    %p45 = scmp.eq.s32.totalorder %s23, 1
    %p46 = por %p44, %p45
    %p48 = scmp.ne.s32.totalorder %s31, %s47
    %p49 = scmp.eq.s32.totalorder %s23, 0
    %p50 = por %p48, %p49
    %s51 = ssub.s32 %s17, %s24
    %p52 = scmp.eq.s32.totalorder %s51, 0
    %s54 = sadd.s32 %s53, 1
    %s55 = scalar_select %p52, %s53, %s54
    %p58 = pneg %p52
    %p59 = scmp.eq.s32.totalorder %s17, 1
    %p60 = por %p58, %p59
    %p61 = scmp.ne.s32.totalorder %s53, %s56
    %p62 = scmp.eq.s32.totalorder %s17, 0
    %p63 = por %p61, %p62
    %p64 = scmp.ne.s32.totalorder %s53, %s56
    %p65 = scmp.eq.s32.totalorder %s22, 1
    %p66 = por %p64, %p65
    %p67 = scmp.ne.s32.totalorder %s56, %s57
    %p68 = scmp.eq.s32.totalorder %s22, 0
    %p69 = por %p67, %p68
    %p70 = scmp.ne.s32.totalorder %s56, %s57
    %p71 = scmp.eq.s32.totalorder %s23, 1
    %p72 = por %p70, %p71
    %p74 = scmp.ne.s32.totalorder %s57, %s73
    %p75 = scmp.eq.s32.totalorder %s23, 0
    %p76 = por %p74, %p75
    %s78 = sadd.s32 %s77, 1
    %p81 = scmp.eq.s32.totalorder %s17, 1
    %p82 = scmp.ne.s32.totalorder %s77, %s79
    %p83 = scmp.eq.s32.totalorder %s17, 0
    %p84 = por %p82, %p83
    %p85 = scmp.ne.s32.totalorder %s77, %s79
    %p86 = scmp.eq.s32.totalorder %s22, 1
    %p87 = por %p85, %p86
    %p88 = scmp.ne.s32.totalorder %s79, %s80
    %p89 = scmp.eq.s32.totalorder %s22, 0
    %p90 = por %p88, %p89
    %p91 = scmp.ne.s32.totalorder %s79, %s80
    %p92 = scmp.eq.s32.totalorder %s23, 1
    %p93 = por %p91, %p92
    %p95 = scmp.ne.s32.totalorder %s80, %s94
    %p96 = scmp.eq.s32.totalorder %s23, 0
    %p97 = por %p95, %p96
    %s99 = sadd.s32 %s98, 1
    %p102 = scmp.eq.s32.totalorder %s17, 1
    %p103 = scmp.ne.s32.totalorder %s98, %s100
    %p104 = scmp.eq.s32.totalorder %s17, 0
    %p105 = por %p103, %p104
    %p106 = scmp.ne.s32.totalorder %s98, %s100
    %p107 = scmp.eq.s32.totalorder %s22, 1
    %p108 = por %p106, %p107
    %p109 = scmp.ne.s32.totalorder %s100, %s101
    %p110 = scmp.eq.s32.totalorder %s22, 0
    %p111 = por %p109, %p110
    %p112 = scmp.ne.s32.totalorder %s100, %s101
    %p113 = scmp.eq.s32.totalorder %s23, 1
    %p114 = por %p112, %p113
    %p116 = scmp.ne.s32.totalorder %s101, %s115
    %p117 = scmp.eq.s32.totalorder %s23, 0
    %p118 = por %p116, %p117
    %s120 = sadd.s32 %s119, 1
    %p123 = scmp.eq.s32.totalorder %s17, 1
    %p124 = scmp.ne.s32.totalorder %s119, %s121
    %p125 = scmp.eq.s32.totalorder %s17, 0
    %p126 = por %p124, %p125
    %p127 = scmp.ne.s32.totalorder %s119, %s121
    %p128 = scmp.eq.s32.totalorder %s22, 1
    %p129 = por %p127, %p128
    %p130 = scmp.ne.s32.totalorder %s121, %s122
    %p131 = scmp.eq.s32.totalorder %s22, 0
    %p132 = por %p130, %p131
    %p133 = scmp.ne.s32.totalorder %s121, %s122
    %p134 = scmp.eq.s32.totalorder %s23, 1
    %p135 = por %p133, %p134
    %p137 = scmp.ne.s32.totalorder %s122, %s136
    %p138 = scmp.eq.s32.totalorder %s23, 0
    %p139 = por %p137, %p138
    %s141 = sadd.s32 %s140, 1
    %p144 = scmp.eq.s32.totalorder %s17, 1
    %p145 = scmp.ne.s32.totalorder %s140, %s142
    %p146 = scmp.eq.s32.totalorder %s17, 0
    %p147 = por %p145, %p146
    %p148 = scmp.ne.s32.totalorder %s140, %s142
    %p149 = scmp.eq.s32.totalorder %s22, 1
    %p150 = por %p148, %p149
    %p151 = scmp.ne.s32.totalorder %s142, %s143
    %p152 = scmp.eq.s32.totalorder %s22, 0
    %p153 = por %p151, %p152
    %p154 = scmp.ne.s32.totalorder %s142, %s143
    %p155 = scmp.eq.s32.totalorder %s23, 1
    %p156 = por %p154, %p155
    %p158 = scmp.ne.s32.totalorder %s143, %s157
    %p159 = scmp.eq.s32.totalorder %s23, 0
    %p160 = por %p158, %p159
    %s162 = sadd.s32 %s161, 1
    %p165 = scmp.eq.s32.totalorder %s17, 1
    %p166 = scmp.ne.s32.totalorder %s161, %s163
    %p167 = scmp.eq.s32.totalorder %s17, 0
    %p168 = por %p166, %p167
    %p169 = scmp.ne.s32.totalorder %s161, %s163
    %p170 = scmp.eq.s32.totalorder %s22, 1
    %p171 = por %p169, %p170
    %p172 = scmp.ne.s32.totalorder %s163, %s164
    %p173 = scmp.eq.s32.totalorder %s22, 0
    %p174 = por %p172, %p173
    %p175 = scmp.ne.s32.totalorder %s163, %s164
    %p176 = scmp.eq.s32.totalorder %s23, 1
    %p177 = por %p175, %p176
    %p179 = scmp.ne.s32.totalorder %s164, %s178
    %p180 = scmp.eq.s32.totalorder %s23, 0
    %p181 = por %p179, %p180
    %s183 = sadd.s32 %s182, 1
    %p186 = scmp.eq.s32.totalorder %s17, 1
    %p187 = scmp.ne.s32.totalorder %s182, %s184
    %p188 = scmp.eq.s32.totalorder %s17, 0
    %p189 = por %p187, %p188
    %p190 = scmp.ne.s32.totalorder %s182, %s184
    %p191 = scmp.eq.s32.totalorder %s22, 1
    %p192 = por %p190, %p191
    %p193 = scmp.ne.s32.totalorder %s184, %s185
    %p194 = scmp.eq.s32.totalorder %s22, 0
    %p195 = por %p193, %p194
    %p196 = scmp.ne.s32.totalorder %s184, %s185
    %p197 = scmp.eq.s32.totalorder %s23, 1
    %p198 = por %p196, %p197
    %p200 = scmp.ne.s32.totalorder %s185, %s199
    %p201 = scmp.eq.s32.totalorder %s23, 0
    %p202 = por %p200, %p201
    %s204 = sadd.s32 %s203, 1
    %p207 = scmp.eq.s32.totalorder %s17, 1
    %p208 = scmp.ne.s32.totalorder %s203, %s205
    %p209 = scmp.eq.s32.totalorder %s17, 0
    %p210 = por %p208, %p209
    %p211 = scmp.ne.s32.totalorder %s203, %s205
    %p212 = scmp.eq.s32.totalorder %s22, 1
    %p213 = por %p211, %p212
    %p214 = scmp.ne.s32.totalorder %s205, %s206
    %p215 = scmp.eq.s32.totalorder %s22, 0
    %p216 = por %p214, %p215
    %p217 = scmp.ne.s32.totalorder %s205, %s206
    %p218 = scmp.eq.s32.totalorder %s23, 1
    %p219 = por %p217, %p218
    %p221 = scmp.ne.s32.totalorder %s206, %s220
    %p222 = scmp.eq.s32.totalorder %s23, 0
    %p223 = por %p221, %p222
    %s225 = sadd.s32 %s224, 1
    %p228 = scmp.eq.s32.totalorder %s17, 1
    %p229 = scmp.ne.s32.totalorder %s224, %s226
    %p230 = scmp.eq.s32.totalorder %s17, 0
    %p231 = por %p229, %p230
    %p232 = scmp.ne.s32.totalorder %s224, %s226
    %p233 = scmp.eq.s32.totalorder %s22, 1
    %p234 = por %p232, %p233
    %p235 = scmp.ne.s32.totalorder %s226, %s227
    %p236 = scmp.eq.s32.totalorder %s22, 0
    %p237 = por %p235, %p236
    %p238 = scmp.ne.s32.totalorder %s226, %s227
    %p239 = scmp.eq.s32.totalorder %s23, 1
    %p240 = por %p238, %p239
    %p242 = scmp.ne.s32.totalorder %s227, %s241
    %p243 = scmp.eq.s32.totalorder %s23, 0
    %p244 = por %p242, %p243
    %s246 = sadd.s32 %s245, 1
    %p249 = scmp.eq.s32.totalorder %s17, 1
    %p250 = scmp.ne.s32.totalorder %s245, %s247
    %p251 = scmp.eq.s32.totalorder %s17, 0
    %p252 = por %p250, %p251
    %p253 = scmp.ne.s32.totalorder %s245, %s247
    %p254 = scmp.eq.s32.totalorder %s22, 1
    %p255 = por %p253, %p254
    %p256 = scmp.ne.s32.totalorder %s247, %s248
    %p257 = scmp.eq.s32.totalorder %s22, 0
    %p258 = por %p256, %p257
    %p259 = scmp.ne.s32.totalorder %s247, %s248
    %p260 = scmp.eq.s32.totalorder %s23, 1
    %p261 = por %p259, %p260
    %p263 = scmp.ne.s32.totalorder %s248, %s262
    %p264 = scmp.eq.s32.totalorder %s23, 0
    %p265 = por %p263, %p264
    %s267 = sadd.s32 %s266, 1
    %p270 = scmp.eq.s32.totalorder %s17, 1
    %p271 = scmp.ne.s32.totalorder %s266, %s268
    %p272 = scmp.eq.s32.totalorder %s17, 0
    %p273 = por %p271, %p272
    %p274 = scmp.ne.s32.totalorder %s266, %s268
    %p275 = scmp.eq.s32.totalorder %s22, 1
    %p276 = por %p274, %p275
    %p277 = scmp.ne.s32.totalorder %s268, %s269
    %p278 = scmp.eq.s32.totalorder %s22, 0
    %p279 = por %p277, %p278
    %p280 = scmp.ne.s32.totalorder %s268, %s269
    %p281 = scmp.eq.s32.totalorder %s23, 1
    %p282 = por %p280, %p281
    %p284 = scmp.ne.s32.totalorder %s269, %s283
    %p285 = scmp.eq.s32.totalorder %s23, 0
    %p286 = por %p284, %p285
    %p287 = scmp.le.s32.totalorder 1, %s17
    %p288 = scmp.lt.s32.totalorder %s17, 3
    %p289 = pnand %p287, %p288
    %p290 = pneg %p289
    // Predicated region
    $region9: #{mlp_pyg_forward.1} parent=5 // pred_check
      _
    $region10: #{mlp_pyg_forward.1} parent=5 // pred_check_branch
      %292 = sbr.rel (%p289) target = $region12
    $region11: #{mlp_pyg_forward.1} parent=5 // pred_region
      %s293 = ssub.s32 %s17, 1
      // Predicated region
      $region13: #{mlp_pyg_forward.1} parent=11 // pred_check
        %p294 = pneg %p90
      $region14: #{mlp_pyg_forward.1} parent=11 // pred_check_branch
        %296 = sbr.rel (%p294) target = $region16
      $region15: #{mlp_pyg_forward.1} parent=11 // pred_region
        _
      $region16: #{mlp_pyg_forward.1} parent=11 // pred_fallthru
        _
      // Predicated region
      $region17: #{mlp_pyg_forward.1} parent=11 // pred_check
        %p297 = pneg %p111
      $region18: #{mlp_pyg_forward.1} parent=11 // pred_check_branch
        %299 = sbr.rel (%p297) target = $region20
      $region19: #{mlp_pyg_forward.1} parent=11 // pred_region
        _
      $region20: #{mlp_pyg_forward.1} parent=11 // pred_fallthru
        _
      // Predicated region
      $region21: #{mlp_pyg_forward.1} parent=11 // pred_check
        %p300 = pneg %p132
      $region22: #{mlp_pyg_forward.1} parent=11 // pred_check_branch
        %302 = sbr.rel (%p300) target = $region24
      $region23: #{mlp_pyg_forward.1} parent=11 // pred_region
        _
      $region24: #{mlp_pyg_forward.1} parent=11 // pred_fallthru
        _
      // Predicated region
      $region25: #{mlp_pyg_forward.1} parent=11 // pred_check
        %p303 = pneg %p153
      $region26: #{mlp_pyg_forward.1} parent=11 // pred_check_branch
        %305 = sbr.rel (%p303) target = $region28
      $region27: #{mlp_pyg_forward.1} parent=11 // pred_region
        _
      $region28: #{mlp_pyg_forward.1} parent=11 // pred_fallthru
        _
      // Predicated region
      $region29: #{mlp_pyg_forward.1} parent=11 // pred_check
        %p306 = pneg %p174
      $region30: #{mlp_pyg_forward.1} parent=11 // pred_check_branch
        %308 = sbr.rel (%p306) target = $region32
      $region31: #{mlp_pyg_forward.1} parent=11 // pred_region
        _
      $region32: #{mlp_pyg_forward.1} parent=11 // pred_fallthru
        _
      // Predicated region
      $region33: #{mlp_pyg_forward.1} parent=11 // pred_check
        %p309 = pneg %p195
      $region34: #{mlp_pyg_forward.1} parent=11 // pred_check_branch
        %311 = sbr.rel (%p309) target = $region36
      $region35: #{mlp_pyg_forward.1} parent=11 // pred_region
        _
      $region36: #{mlp_pyg_forward.1} parent=11 // pred_fallthru
        _
      // Predicated region
      $region37: #{mlp_pyg_forward.1} parent=11 // pred_check
        %p312 = pneg %p216
      $region38: #{mlp_pyg_forward.1} parent=11 // pred_check_branch
        %314 = sbr.rel (%p312) target = $region40
      $region39: #{mlp_pyg_forward.1} parent=11 // pred_region
        _
      $region40: #{mlp_pyg_forward.1} parent=11 // pred_fallthru
        _
      // Predicated region
      $region41: #{mlp_pyg_forward.1} parent=11 // pred_check
        %p315 = pneg %p237
      $region42: #{mlp_pyg_forward.1} parent=11 // pred_check_branch
        %317 = sbr.rel (%p315) target = $region44
      $region43: #{mlp_pyg_forward.1} parent=11 // pred_region
        _
      $region44: #{mlp_pyg_forward.1} parent=11 // pred_fallthru
        _
      // Predicated region
      $region45: #{mlp_pyg_forward.1} parent=11 // pred_check
        %p318 = pneg %p258
      $region46: #{mlp_pyg_forward.1} parent=11 // pred_check_branch
        %320 = sbr.rel (%p318) target = $region48
      $region47: #{mlp_pyg_forward.1} parent=11 // pred_region
        _
      $region48: #{mlp_pyg_forward.1} parent=11 // pred_fallthru
        _
    $region12: #{mlp_pyg_forward.1} parent=5 // pred_fallthru
      _
    %p321 = scmp.lt.s32.totalorder %s17, 2
    // Predicated region
    $region49: #{mlp_pyg_forward.1} parent=5 // pred_check
      %p322 = pneg %p321
    $region50: #{mlp_pyg_forward.1} parent=5 // pred_check_branch
      %324 = sbr.rel (%p322) target = $region52
    $region51: #{mlp_pyg_forward.1} parent=5 // pred_region
      // Predicated region
      $region53: #{mlp_pyg_forward.1} parent=51 // pred_check
        %p325 = pneg %p37
      $region54: #{mlp_pyg_forward.1} parent=51 // pred_check_branch
        %327 = sbr.rel (%p325) target = $region56
      $region55: #{mlp_pyg_forward.1} parent=51 // pred_region
        %p328 = scmp.lt.s32.totalorder %s17, 1
        %s329 = scalar_select %p328, %s17, 1
        %s330 = scalar_lea.vmem %s0, %s329
      $region56: #{mlp_pyg_forward.1} parent=51 // pred_fallthru
        _
      // Predicated region
      $region57: #{mlp_pyg_forward.1} parent=51 // pred_check
        %p331 = pneg %p63
      $region58: #{mlp_pyg_forward.1} parent=51 // pred_check_branch
        %333 = sbr.rel (%p331) target = $region60
      $region59: #{mlp_pyg_forward.1} parent=51 // pred_region
        %s334 = smul.u32 16, %s17
        %p335 = scmp.lt.s32.totalorder %s334, 31
        %s336 = scalar_select %p335, %s334, 31
        %s337 = smul.addr %s336, 4
        %s338 = scalar_lea.vmem %s1, %s337
        %s339 = smul.u32 16, %s17
      $region60: #{mlp_pyg_forward.1} parent=51 // pred_fallthru
        _
    $region52: #{mlp_pyg_forward.1} parent=5 // pred_fallthru
      _
    %p340 = scmp.le.s32.totalorder 1, %s17
    %p341 = scmp.lt.s32.totalorder %s17, 3
    %p342 = pnand %p340, %p341
    %p343 = pneg %p342
    // Predicated region
    $region61: #{mlp_pyg_forward.1} parent=5 // pred_check
      _
    $region62: #{mlp_pyg_forward.1} parent=5 // pred_check_branch
      %345 = sbr.rel (%p342) target = $region64
    $region63: #{mlp_pyg_forward.1} parent=5 // pred_region
      %s346 = ssub.s32 %s17, 1
      %p347 = scmp.lt.s32.totalorder %s22, 1
      %s348 = scalar_select %p347, %s22, 1
      %s349 = scalar_lea.vmem %s0, %s348
      %p350 = pneg %p43
      %p351 = pneg %p40
      %s352 = smul.u32 16, %s22
      %p353 = scmp.lt.s32.totalorder %s352, 31
      %s354 = scalar_select %p353, %s352, 31
      %s355 = smul.addr %s354, 4
      %s356 = scalar_lea.vmem %s1, %s355
      %p357 = pneg %p69
      %p358 = pneg %p66
      %p359 = pneg %p90
      %p360 = pneg %p87
      %p361 = pneg %p111
      %p362 = pneg %p108
      %p363 = pneg %p132
      %p364 = pneg %p129
      %p365 = pneg %p153
      %p366 = pneg %p150
      %p367 = pneg %p174
      %p368 = pneg %p171
      %p369 = pneg %p195
      %p370 = pneg %p192
      %p371 = pneg %p216
      %p372 = pneg %p213
      %p373 = pneg %p237
      %p374 = pneg %p234
      %p375 = pneg %p258
      %p376 = pneg %p255
      %p377 = pneg %p279
      %p378 = pneg %p276
      %p379 = scmp.lt.s32.totalorder %s22, 1
      %s380 = scalar_select %p379, %s22, 1
      %s381 = scalar_lea.vmem %s0, %s380
      %s382 = smul.u32 16, %s22
      %p383 = scmp.lt.s32.totalorder %s382, 31
      %s384 = scalar_select %p383, %s382, 31
      %s385 = smul.addr %s384, 4
      %s386 = scalar_lea.vmem %s1, %s385
      %s387 = smul.u32 16, %s22
      %p389 = scmp.eq.s32.totalorder %s22, 0
      // Predicated region
      $region65: #{mlp_pyg_forward.1} parent=63 // pred_check
        %p390 = pneg %p389
      $region66: #{mlp_pyg_forward.1} parent=63 // pred_check_branch
        %392 = sbr.rel (%p390) target = $region68
      $region67: #{mlp_pyg_forward.1} parent=63 // pred_region
        %393 = vst [vmem:[#allocation2] sm:$0xff] 0.0
      $region68: #{mlp_pyg_forward.1} parent=63 // pred_fallthru
        _
      %v394 = vld [vmem:[%s386] sm:$0xf]
      %v395 = vld [vmem:[%s386 + $0x4] sm:$0xf]
      %v396 = vld [vmem:[%s386 + $0x8] sm:$0xf]
      %v397 = vld [vmem:[%s386 + $0xc] sm:$0xf]
      %v398 = vld [vmem:[%s386 + $0x10] sm:$0xf]
      %v399 = vld [vmem:[%s386 + $0x14] sm:$0xf]
      %v400 = vld [vmem:[%s386 + $0x18] sm:$0xf]
      %v401 = vld [vmem:[%s386 + $0x1c] sm:$0xf]
      %v402 = vld [vmem:[%s386 + $0x20] sm:$0xf]
      %v403 = vld [vmem:[%s386 + $0x24] sm:$0xf]
      %v404 = vld [vmem:[%s386 + $0x28] sm:$0xf]
      %v405 = vld [vmem:[%s386 + $0x2c] sm:$0xf]
      %v406 = vld [vmem:[%s386 + $0x30] sm:$0xf]
      %v407 = vld [vmem:[%s386 + $0x34] sm:$0xf]
      %v408 = vld [vmem:[%s386 + $0x38] sm:$0xf]
      %v409 = vld [vmem:[%s386 + $0x3c] sm:$0xf]
      %v410 = vld [vmem:[%s3] sm:$0xf]
      %v411 = vld [vmem:[%s4] sm:$0x1]
      %v413 = vperm.slane %v411, 0
      %v431 = vunpack.c.l.b16 %v394
      %v432 = vunpack.c.l.b16 %v395
      %v433 = vunpack.c.l.b16 %v396
      %v434 = vunpack.c.l.b16 %v397
      %v435 = vunpack.c.l.b16 %v398
      %v436 = vunpack.c.l.b16 %v399
      %v437 = vunpack.c.l.b16 %v400
      %v438 = vunpack.c.l.b16 %v401
      %v439 = vunpack.c.l.b16 %v402
      %v440 = vunpack.c.l.b16 %v403
      %v441 = vunpack.c.l.b16 %v404
      %v442 = vunpack.c.l.b16 %v405
      %v443 = vunpack.c.l.b16 %v406
      %v444 = vunpack.c.l.b16 %v407
      %v445 = vunpack.c.l.b16 %v408
      %v446 = vunpack.c.l.b16 %v409
      %v447 = vpack.c.b16 %v432, %v431
      %v448 = vpack.c.b16 %v434, %v433
      %v449 = vpack.c.b16 %v436, %v435
      %v450 = vpack.c.b16 %v438, %v437
      %v451 = vpack.c.b16 %v440, %v439
      %v452 = vpack.c.b16 %v442, %v441
      %v453 = vpack.c.b16 %v444, %v443
      %v454 = vpack.c.b16 %v446, %v445
      %vm455 = vcmask 64512
      %v457 = vsel %vm455, %v447, 0
      %v460 = vsel %vm455, %v448, 0
      %v463 = vsel %vm455, %v449, 0
      %v466 = vsel %vm455, %v450, 0
      %v469 = vsel %vm455, %v451, 0
      %v472 = vsel %vm455, %v452, 0
      %v475 = vsel %vm455, %v453, 0
      %v478 = vsel %vm455, %v454, 0
      %vm480 = vcmask 1043456
      %v482 = vsel %vm480, %v410, 0
      %484 = vmatpush.bf16.msra.mxu0 0
      %485 = vmatpush.bf16.msra.mxu0 0
      %486 = vmatpush.bf16.msra.mxu0 0
      %487 = vmatpush.bf16.msra.mxu0 0
      %488 = vmatpush.bf16.msra.mxu0 0
      %489 = vmatpush.bf16.msra.mxu0 0
      %490 = vmatpush.bf16.msra.mxu0 0
      %491 = vmatpush.bf16.msra.mxu0 %v482
      %492 = vmatmul.bf16.gmra.mxu0 %v457
      %v493 = vpop.f32.mrf.mxu0
      %v494 = vadd.f32 %v413, %v493
      %v495 = vpop.f32.mrf.mxu0
      %v496 = vadd.f32 %v413, %v495
      %497 = vmatmul.bf16.gmra.mxu0 %v460
      %v498 = vpop.f32.mrf.mxu0
      %v499 = vadd.f32 %v413, %v498
      %v500 = vpop.f32.mrf.mxu0
      %v501 = vadd.f32 %v413, %v500
      %502 = vmatmul.bf16.gmra.mxu0 %v463
      %v503 = vpop.f32.mrf.mxu0
      %v504 = vadd.f32 %v413, %v503
      %v505 = vpop.f32.mrf.mxu0
      %v506 = vadd.f32 %v413, %v505
      %507 = vmatmul.bf16.gmra.mxu0 %v466
      %v508 = vpop.f32.mrf.mxu0
      %v509 = vadd.f32 %v413, %v508
      %v510 = vpop.f32.mrf.mxu0
      %v511 = vadd.f32 %v413, %v510
      %512 = vmatmul.bf16.gmra.mxu0 %v469
      %v513 = vpop.f32.mrf.mxu0
      %v514 = vadd.f32 %v413, %v513
      %v515 = vpop.f32.mrf.mxu0
      %v516 = vadd.f32 %v413, %v515
      %517 = vmatmul.bf16.gmra.mxu0 %v472
      %v518 = vpop.f32.mrf.mxu0
      %v519 = vadd.f32 %v413, %v518
      %v520 = vpop.f32.mrf.mxu0
      %v521 = vadd.f32 %v413, %v520
      %522 = vmatmul.bf16.gmra.mxu0 %v475
      %v523 = vpop.f32.mrf.mxu0
      %v524 = vadd.f32 %v413, %v523
      %v525 = vpop.f32.mrf.mxu0
      %v526 = vadd.f32 %v413, %v525
      %527 = vmatmul.bf16.gmra.mxu0 %v478
      %v528 = vpop.f32.mrf.mxu0
      %v529 = vadd.f32 %v413, %v528
      %v530 = vpop.f32.mrf.mxu0
      %v531 = vadd.f32 %v413, %v530
      %532 = vdwg.mxu0
      %v533 = vmax.f32 %v494, 0.0
      %v534 = vmax.f32 %v496, 0.0
      %v535 = vmax.f32 %v499, 0.0
      %v536 = vmax.f32 %v501, 0.0
      %v537 = vmax.f32 %v504, 0.0
      %v538 = vmax.f32 %v506, 0.0
      %v539 = vmax.f32 %v509, 0.0
      %v540 = vmax.f32 %v511, 0.0
      %v541 = vmax.f32 %v514, 0.0
      %v542 = vmax.f32 %v516, 0.0
      %v543 = vmax.f32 %v519, 0.0
      %v544 = vmax.f32 %v521, 0.0
      %v545 = vmax.f32 %v524, 0.0
      %v546 = vmax.f32 %v526, 0.0
      %v547 = vmax.f32 %v529, 0.0
      %v548 = vmax.f32 %v531, 0.0
      %v549 = vpack.c.bf16 %v534, %v533
      %v550 = vpack.c.bf16 %v536, %v535
      %v551 = vpack.c.bf16 %v538, %v537
      %v552 = vpack.c.bf16 %v540, %v539
      %v553 = vpack.c.bf16 %v542, %v541
      %v554 = vpack.c.bf16 %v544, %v543
      %v555 = vpack.c.bf16 %v546, %v545
      %v556 = vpack.c.bf16 %v548, %v547
      %v557 = vld [vmem:[%s5] sm:$0xf]
      %v558 = vld [vmem:[%s5 + $0x4] sm:$0xf]
      %v559 = vld [vmem:[%s5 + $0x8] sm:$0xf]
      %v560 = vld [vmem:[%s5 + $0xc] sm:$0xf]
      %v561 = vld [vmem:[%s5 + $0x10] sm:$0xf]
      %v562 = vld [vmem:[%s5 + $0x14] sm:$0xf]
      %v563 = vld [vmem:[%s5 + $0x18] sm:$0xf]
      %v564 = vld [vmem:[%s5 + $0x1c] sm:$0xf]
      %v565 = vld [vmem:[%s5 + $0x20] sm:$0xf]
      %v566 = vld [vmem:[%s5 + $0x24] sm:$0xf]
      %v567 = vld [vmem:[%s5 + $0x28] sm:$0xf]
      %v568 = vld [vmem:[%s5 + $0x2c] sm:$0xf]
      %v569 = vld [vmem:[%s5 + $0x30] sm:$0xf]
      %v570 = vld [vmem:[%s5 + $0x34] sm:$0xf]
      %v571 = vld [vmem:[%s5 + $0x38] sm:$0xf]
      %v572 = vld [vmem:[%s5 + $0x3c] sm:$0xf]
      %v573 = vld [vmem:[%s6] sm:$0x1]
      %v575 = vperm.slane %v573, 0
      %v593 = vunpack.c.l.b16 %v557
      %v594 = vunpack.c.l.b16 %v558
      %v595 = vunpack.c.l.b16 %v559
      %v596 = vunpack.c.l.b16 %v560
      %v597 = vunpack.c.l.b16 %v561
      %v598 = vunpack.c.l.b16 %v562
      %v599 = vunpack.c.l.b16 %v563
      %v600 = vunpack.c.l.b16 %v564
      %v601 = vunpack.c.l.b16 %v565
      %v602 = vunpack.c.l.b16 %v566
      %v603 = vunpack.c.l.b16 %v567
      %v604 = vunpack.c.l.b16 %v568
      %v605 = vunpack.c.l.b16 %v569
      %v606 = vunpack.c.l.b16 %v570
      %v607 = vunpack.c.l.b16 %v571
      %v608 = vunpack.c.l.b16 %v572
      %v609 = vpack.c.b16 %v594, %v593
      %v610 = vpack.c.b16 %v596, %v595
      %v611 = vpack.c.b16 %v598, %v597
      %v612 = vpack.c.b16 %v600, %v599
      %v613 = vpack.c.b16 %v602, %v601
      %v614 = vpack.c.b16 %v604, %v603
      %v615 = vpack.c.b16 %v606, %v605
      %v616 = vpack.c.b16 %v608, %v607
      %625 = vmatpush.bf16.msra.mxu0 %v616
      %626 = vmatpush.bf16.msra.mxu0 %v615
      %627 = vmatpush.bf16.msra.mxu0 %v614
      %628 = vmatpush.bf16.msra.mxu0 %v613
      %629 = vmatpush.bf16.msra.mxu0 %v612
      %630 = vmatpush.bf16.msra.mxu0 %v611
      %631 = vmatpush.bf16.msra.mxu0 %v610
      %632 = vmatpush.bf16.msra.mxu0 %v609
      %633 = vmatmul.bf16.gmra.mxu0 %v549
      %v634 = vpop.f32.mrf.mxu0
      %v635 = vadd.f32 %v575, %v634
      %v636 = vpop.f32.mrf.mxu0
      %v637 = vadd.f32 %v575, %v636
      %638 = vmatmul.bf16.gmra.mxu0 %v550
      %v639 = vpop.f32.mrf.mxu0
      %v640 = vadd.f32 %v575, %v639
      %v641 = vpop.f32.mrf.mxu0
      %v642 = vadd.f32 %v575, %v641
      %643 = vmatmul.bf16.gmra.mxu0 %v551
      %v644 = vpop.f32.mrf.mxu0
      %v645 = vadd.f32 %v575, %v644
      %v646 = vpop.f32.mrf.mxu0
      %v647 = vadd.f32 %v575, %v646
      %648 = vmatmul.bf16.gmra.mxu0 %v552
      %v649 = vpop.f32.mrf.mxu0
      %v650 = vadd.f32 %v575, %v649
      %v651 = vpop.f32.mrf.mxu0
      %v652 = vadd.f32 %v575, %v651
      %653 = vmatmul.bf16.gmra.mxu0 %v553
      %v654 = vpop.f32.mrf.mxu0
      %v655 = vadd.f32 %v575, %v654
      %v656 = vpop.f32.mrf.mxu0
      %v657 = vadd.f32 %v575, %v656
      %658 = vmatmul.bf16.gmra.mxu0 %v554
      %v659 = vpop.f32.mrf.mxu0
      %v660 = vadd.f32 %v575, %v659
      %v661 = vpop.f32.mrf.mxu0
      %v662 = vadd.f32 %v575, %v661
      %663 = vmatmul.bf16.gmra.mxu0 %v555
      %v664 = vpop.f32.mrf.mxu0
      %v665 = vadd.f32 %v575, %v664
      %v666 = vpop.f32.mrf.mxu0
      %v667 = vadd.f32 %v575, %v666
      %668 = vmatmul.bf16.gmra.mxu0 %v556
      %v669 = vpop.f32.mrf.mxu0
      %v670 = vadd.f32 %v575, %v669
      %v671 = vpop.f32.mrf.mxu0
      %v672 = vadd.f32 %v575, %v671
      %673 = vdwg.mxu0
      %v674 = vmax.f32 %v635, 0.0
      %v675 = vmax.f32 %v637, 0.0
      %v676 = vmax.f32 %v640, 0.0
      %v677 = vmax.f32 %v642, 0.0
      %v678 = vmax.f32 %v645, 0.0
      %v679 = vmax.f32 %v647, 0.0
      %v680 = vmax.f32 %v650, 0.0
      %v681 = vmax.f32 %v652, 0.0
      %v682 = vmax.f32 %v655, 0.0
      %v683 = vmax.f32 %v657, 0.0
      %v684 = vmax.f32 %v660, 0.0
      %v685 = vmax.f32 %v662, 0.0
      %v686 = vmax.f32 %v665, 0.0
      %v687 = vmax.f32 %v667, 0.0
      %v688 = vmax.f32 %v670, 0.0
      %v689 = vmax.f32 %v672, 0.0
      %v690 = vpack.c.bf16 %v675, %v674
      %v691 = vpack.c.bf16 %v677, %v676
      %v692 = vpack.c.bf16 %v679, %v678
      %v693 = vpack.c.bf16 %v681, %v680
      %v694 = vpack.c.bf16 %v683, %v682
      %v695 = vpack.c.bf16 %v685, %v684
      %v696 = vpack.c.bf16 %v687, %v686
      %v697 = vpack.c.bf16 %v689, %v688
      %v698 = vld [vmem:[%s7] sm:$0xf]
      %v699 = vld [vmem:[%s7 + $0x4] sm:$0xf]
      %v700 = vld [vmem:[%s7 + $0x8] sm:$0xf]
      %v701 = vld [vmem:[%s7 + $0xc] sm:$0xf]
      %v702 = vld [vmem:[%s7 + $0x10] sm:$0xf]
      %v703 = vld [vmem:[%s7 + $0x14] sm:$0xf]
      %v704 = vld [vmem:[%s7 + $0x18] sm:$0xf]
      %v705 = vld [vmem:[%s7 + $0x1c] sm:$0xf]
      %v706 = vld [vmem:[%s7 + $0x20] sm:$0xf]
      %v707 = vld [vmem:[%s7 + $0x24] sm:$0xf]
      %v708 = vld [vmem:[%s7 + $0x28] sm:$0xf]
      %v709 = vld [vmem:[%s7 + $0x2c] sm:$0xf]
      %v710 = vld [vmem:[%s7 + $0x30] sm:$0xf]
      %v711 = vld [vmem:[%s7 + $0x34] sm:$0xf]
      %v712 = vld [vmem:[%s7 + $0x38] sm:$0xf]
      %v713 = vld [vmem:[%s7 + $0x3c] sm:$0xf]
      %v714 = vld [vmem:[%s8] sm:$0x1]
      %v716 = vperm.slane %v714, 0
      %v734 = vunpack.c.l.b16 %v698
      %v735 = vunpack.c.l.b16 %v699
      %v736 = vunpack.c.l.b16 %v700
      %v737 = vunpack.c.l.b16 %v701
      %v738 = vunpack.c.l.b16 %v702
      %v739 = vunpack.c.l.b16 %v703
      %v740 = vunpack.c.l.b16 %v704
      %v741 = vunpack.c.l.b16 %v705
      %v742 = vunpack.c.l.b16 %v706
      %v743 = vunpack.c.l.b16 %v707
      %v744 = vunpack.c.l.b16 %v708
      %v745 = vunpack.c.l.b16 %v709
      %v746 = vunpack.c.l.b16 %v710
      %v747 = vunpack.c.l.b16 %v711
      %v748 = vunpack.c.l.b16 %v712
      %v749 = vunpack.c.l.b16 %v713
      %v750 = vpack.c.b16 %v735, %v734
      %v751 = vpack.c.b16 %v737, %v736
      %v752 = vpack.c.b16 %v739, %v738
      %v753 = vpack.c.b16 %v741, %v740
      %v754 = vpack.c.b16 %v743, %v742
      %v755 = vpack.c.b16 %v745, %v744
      %v756 = vpack.c.b16 %v747, %v746
      %v757 = vpack.c.b16 %v749, %v748
      %766 = vmatpush.bf16.msra.mxu0 %v757
      %767 = vmatpush.bf16.msra.mxu0 %v756
      %768 = vmatpush.bf16.msra.mxu0 %v755
      %769 = vmatpush.bf16.msra.mxu0 %v754
      %770 = vmatpush.bf16.msra.mxu0 %v753
      %771 = vmatpush.bf16.msra.mxu0 %v752
      %772 = vmatpush.bf16.msra.mxu0 %v751
      %773 = vmatpush.bf16.msra.mxu0 %v750
      %774 = vmatmul.bf16.gmra.mxu0 %v690
      %v775 = vpop.f32.mrf.mxu0
      %v776 = vadd.f32 %v716, %v775
      %v777 = vpop.f32.mrf.mxu0
      %v778 = vadd.f32 %v716, %v777
      %779 = vmatmul.bf16.gmra.mxu0 %v691
      %v780 = vpop.f32.mrf.mxu0
      %v781 = vadd.f32 %v716, %v780
      %v782 = vpop.f32.mrf.mxu0
      %v783 = vadd.f32 %v716, %v782
      %784 = vmatmul.bf16.gmra.mxu0 %v692
      %v785 = vpop.f32.mrf.mxu0
      %v786 = vadd.f32 %v716, %v785
      %v787 = vpop.f32.mrf.mxu0
      %v788 = vadd.f32 %v716, %v787
      %789 = vmatmul.bf16.gmra.mxu0 %v693
      %v790 = vpop.f32.mrf.mxu0
      %v791 = vadd.f32 %v716, %v790
      %v792 = vpop.f32.mrf.mxu0
      %v793 = vadd.f32 %v716, %v792
      %794 = vmatmul.bf16.gmra.mxu0 %v694
      %v795 = vpop.f32.mrf.mxu0
      %v796 = vadd.f32 %v716, %v795
      %v797 = vpop.f32.mrf.mxu0
      %v798 = vadd.f32 %v716, %v797
      %799 = vmatmul.bf16.gmra.mxu0 %v695
      %v800 = vpop.f32.mrf.mxu0
      %v801 = vadd.f32 %v716, %v800
      %v802 = vpop.f32.mrf.mxu0
      %v803 = vadd.f32 %v716, %v802
      %804 = vmatmul.bf16.gmra.mxu0 %v696
      %v805 = vpop.f32.mrf.mxu0
      %v806 = vadd.f32 %v716, %v805
      %v807 = vpop.f32.mrf.mxu0
      %v808 = vadd.f32 %v716, %v807
      %809 = vmatmul.bf16.gmra.mxu0 %v697
      %v810 = vpop.f32.mrf.mxu0
      %v811 = vadd.f32 %v716, %v810
      %v812 = vpop.f32.mrf.mxu0
      %v813 = vadd.f32 %v716, %v812
      %814 = vdwg.mxu0
      %v815 = vmax.f32 %v776, 0.0
      %v816 = vmax.f32 %v778, 0.0
      %v817 = vmax.f32 %v781, 0.0
      %v818 = vmax.f32 %v783, 0.0
      %v819 = vmax.f32 %v786, 0.0
      %v820 = vmax.f32 %v788, 0.0
      %v821 = vmax.f32 %v791, 0.0
      %v822 = vmax.f32 %v793, 0.0
      %v823 = vmax.f32 %v796, 0.0
      %v824 = vmax.f32 %v798, 0.0
      %v825 = vmax.f32 %v801, 0.0
      %v826 = vmax.f32 %v803, 0.0
      %v827 = vmax.f32 %v806, 0.0
      %v828 = vmax.f32 %v808, 0.0
      %v829 = vmax.f32 %v811, 0.0
      %v830 = vmax.f32 %v813, 0.0
      %v831 = vlaneseq
      %v832 = vshrl.u32 %v831, 7
      %v833 = vld [vmem:[%s381] sm:$0x1]
      %v834 = vperm.slane %v833, 0
      %vm835 = vcmp.eq.s32.totalorder %v834, %v832
      %v836 = vsel %vm835, 1, 0
      %v837 = vcvt.s32.f32 %v836
      %v838 = vld [vmem:[#allocation2] sm:$0xff]
      %839 = vmatpush.msra.mxu0 %v830
      %840 = vmatpush.msra.mxu0 %v829
      %841 = vmatpush.msra.mxu0 %v828
      %842 = vmatpush.msra.mxu0 %v827
      %843 = vmatpush.msra.mxu0 %v826
      %844 = vmatpush.msra.mxu0 %v825
      %845 = vmatpush.msra.mxu0 %v824
      %846 = vmatpush.msra.mxu0 %v823
      %847 = vmatpush.msra.mxu0 %v822
      %848 = vmatpush.msra.mxu0 %v821
      %849 = vmatpush.msra.mxu0 %v820
      %850 = vmatpush.msra.mxu0 %v819
      %851 = vmatpush.msra.mxu0 %v818
      %852 = vmatpush.msra.mxu0 %v817
      %853 = vmatpush.msra.mxu0 %v816
      %854 = vmatpush.msra.mxu0 %v815
      %855 = vmatmul.f32.gmra.mxu0 %v837
      %v856 = vpop.f32.mrf.mxu0
      %v857 = vadd.f32 0.0, %v856
      %858 = vdwg.mxu0
      %v859 = vadd.f32 %v838, %v857
      %860 = vst [vmem:[#allocation2] sm:$0xff] %v859
      %p861 = scmp.eq.s32.totalorder %s22, 1
      // Predicated region
      $region69: #{mlp_pyg_forward.1} parent=63 // pred_check
        %p862 = pneg %p861
      $region70: #{mlp_pyg_forward.1} parent=63 // pred_check_branch
        %864 = sbr.rel (%p862) target = $region72
      $region71: #{mlp_pyg_forward.1} parent=63 // pred_region
        %v865 = vld [vmem:[#allocation2] sm:$0xff]
        %v866 = vld [vmem:[%s2] sm:$0xff]
        %868 = vset.pattern.permute.xlu0 0
        %869 = vperm.xlu0 %868, %v866
        %v870 = vpop.permute.xlu0 %869
        %v872 = vmul.f32 %v865, %v870
        %v873 = vld [vmem:[%s9] sm:$0xf]
        %v874 = vld [vmem:[%s9 + $0x4] sm:$0xf]
        %v875 = vld [vmem:[%s9 + $0x8] sm:$0xf]
        %v876 = vld [vmem:[%s9 + $0xc] sm:$0xf]
        %v877 = vld [vmem:[%s9 + $0x10] sm:$0xf]
        %v878 = vld [vmem:[%s9 + $0x14] sm:$0xf]
        %v879 = vld [vmem:[%s9 + $0x18] sm:$0xf]
        %v880 = vld [vmem:[%s9 + $0x1c] sm:$0xf]
        %v881 = vld [vmem:[%s9 + $0x20] sm:$0xf]
        %v882 = vld [vmem:[%s9 + $0x24] sm:$0xf]
        %v883 = vld [vmem:[%s9 + $0x28] sm:$0xf]
        %v884 = vld [vmem:[%s9 + $0x2c] sm:$0xf]
        %v885 = vld [vmem:[%s9 + $0x30] sm:$0xf]
        %v886 = vld [vmem:[%s9 + $0x34] sm:$0xf]
        %v887 = vld [vmem:[%s9 + $0x38] sm:$0xf]
        %v888 = vld [vmem:[%s9 + $0x3c] sm:$0xf]
        %v889 = vunpack.c.l.bf16 %v873
        %v890 = vunpack.c.l.bf16 %v874
        %v891 = vunpack.c.l.bf16 %v875
        %v892 = vunpack.c.l.bf16 %v876
        %v893 = vunpack.c.l.bf16 %v877
        %v894 = vunpack.c.l.bf16 %v878
        %v895 = vunpack.c.l.bf16 %v879
        %v896 = vunpack.c.l.bf16 %v880
        %v897 = vunpack.c.l.bf16 %v881
        %v898 = vunpack.c.l.bf16 %v882
        %v899 = vunpack.c.l.bf16 %v883
        %v900 = vunpack.c.l.bf16 %v884
        %v901 = vunpack.c.l.bf16 %v885
        %v902 = vunpack.c.l.bf16 %v886
        %v903 = vunpack.c.l.bf16 %v887
        %v904 = vunpack.c.l.bf16 %v888
        %v905 = vld [vmem:[%s10] sm:$0x1]
        %v907 = vperm.slane %v905, 0
        %909 = vmatpush.msra.mxu0 %v904
        %910 = vmatpush.msra.mxu0 %v903
        %911 = vmatpush.msra.mxu0 %v902
        %912 = vmatpush.msra.mxu0 %v901
        %913 = vmatpush.msra.mxu0 %v900
        %914 = vmatpush.msra.mxu0 %v899
        %915 = vmatpush.msra.mxu0 %v898
        %916 = vmatpush.msra.mxu0 %v897
        %917 = vmatpush.msra.mxu0 %v896
        %918 = vmatpush.msra.mxu0 %v895
        %919 = vmatpush.msra.mxu0 %v894
        %920 = vmatpush.msra.mxu0 %v893
        %921 = vmatpush.msra.mxu0 %v892
        %922 = vmatpush.msra.mxu0 %v891
        %923 = vmatpush.msra.mxu0 %v890
        %924 = vmatpush.msra.mxu0 %v889
        %925 = vmatmul.f32.gmra.mxu0 %v872
        %v926 = vpop.f32.mrf.mxu0
        %v927 = vadd.f32 %v907, %v926
        %928 = vdwg.mxu0
        %929 = vst [vmem:[%s11] sm:$0xff] %v927
      $region72: #{mlp_pyg_forward.1} parent=63 // pred_fallthru
        _
      // Predicated region
      $region73: #{mlp_pyg_forward.1} parent=63 // pred_check
        %p930 = pneg %p276
      $region74: #{mlp_pyg_forward.1} parent=63 // pred_check_branch
        %932 = sbr.rel (%p930) target = $region76
      $region75: #{mlp_pyg_forward.1} parent=63 // pred_region
        _
      $region76: #{mlp_pyg_forward.1} parent=63 // pred_fallthru
        _
      // Predicated region
      $region77: #{mlp_pyg_forward.1} parent=63 // pred_check
        %p933 = pneg %p276
      $region78: #{mlp_pyg_forward.1} parent=63 // pred_check_branch
        %935 = sbr.rel (%p933) target = $region80
      $region79: #{mlp_pyg_forward.1} parent=63 // pred_region
        _
      $region80: #{mlp_pyg_forward.1} parent=63 // pred_fallthru
        _
    $region64: #{mlp_pyg_forward.1} parent=5 // pred_fallthru
      _
    %p936 = scmp.le.s32.totalorder 2, %s17
    // Predicated region
    $region81: #{mlp_pyg_forward.1} parent=5 // pred_check
      %p937 = pneg %p936
    $region82: #{mlp_pyg_forward.1} parent=5 // pred_check_branch
      %939 = sbr.rel (%p937) target = $region84
    $region83: #{mlp_pyg_forward.1} parent=5 // pred_region
      %s940 = ssub.s32 %s17, 2
    $region84: #{mlp_pyg_forward.1} parent=5 // pred_fallthru
      _
  $region6: #{mlp_pyg_forward.1} parent=0 // loop_footer
    %s21 = sadd.s32 1, %s17
  $region7: #{mlp_pyg_forward.1} parent=0 // loop_footer_branch
    %16 = sbr.rel target = $region3
  $region8: #{mlp_pyg_forward.1} parent=0 // loop_exit
    _

</llo_original>
